<compile_context>
chip_gen: v6e
topology: v6e:2x2x1
jax: 0.10.0
libtpu: 0.0.40
codegen_flags: <defaults>
</compile_context>

<pallas_src>
import functools

import numpy as np
import jax
import jax.numpy as jnp
from jax.experimental import pallas as pl
from jax.experimental.pallas import tpu as pltpu


def _sigmoid(z, dtype):
    # sigmoid(z) == 0.5 * tanh(0.5 * z) + 0.5 (exact identity): keeps the
    # transcendental on the EUP instead of exp + full-precision divide.
    zh = (0.5 * z).astype(dtype)
    return 0.5 * jnp.tanh(zh) + 0.5          # stays in `dtype` (weak scalars)


def _mlp_kernel(x_ref, w1_ref, b1_ref, w2_ref, b2_ref, w3_ref, b3_ref, o_ref,
                *, act_dtype):
    # Lane-dense layout: batch on lanes (last, 128-wide axis), features on
    # sublanes.  All loads/stores are full-width (unmasked) vector ops.
    x = x_ref[...]                                                  # (3, TN) f32

    # layer 1: Linear(3 -> 15) + sigmoid        z1 = W1 @ X + b1
    z1 = jnp.dot(w1_ref[...], x, preferred_element_type=jnp.float32)
    h1 = _sigmoid(z1 + b1_ref[...], act_dtype)                      # (15, TN)

    # layer 2: Linear(15 -> 8) + sigmoid        (w2 already in act_dtype)
    z2 = jnp.dot(w2_ref[...], h1, preferred_element_type=jnp.float32)
    h2 = _sigmoid(z2 + b2_ref[...], act_dtype)                      # (8, TN)

    # layer 3: Linear(8 -> 1), no activation
    z3 = jnp.dot(w3_ref[...], h2, preferred_element_type=jnp.float32)
    o_ref[...] = (z3 + b3_ref[...]).astype(o_ref.dtype)             # (1, TN)


def _choose_tile(n, tile_n):
    """Lane-aligned tile width and padded batch size."""
    n128 = 128 * pl.cdiv(n, 128)                       # total lanes needed
    tn = max(128, (min(tile_n, n128) // 128) * 128)    # multiple of 128, >=128
    # Prefer >=2 grid steps when there is enough work so the "parallel"
    # batch axis can shard across TensorCores on multi-TC chips (v7x).
    if n128 > 256 and pl.cdiv(n128, tn) < 2:
        tn = max(128, 128 * pl.cdiv(pl.cdiv(n128, 2), 128))
    n_pad = tn * pl.cdiv(n128, tn)
    return tn, n_pad


@functools.partial(jax.jit, static_argnames=("tile_n", "bf16_act"))
def mlp_regression(x, params, tile_n=65536, bf16_act=False):
    """x: (N, 3) float32.  params: torch-layout weights/biases (see make_params).

    Returns shape (N,) — matches torch `output[:, 0]`.
    """
    n = x.shape[0]
    act_dtype = jnp.bfloat16 if bf16_act else jnp.float32

    w1, b1 = params["w1"], params["b1"]                     # (15, 3), (15, 1)
    w2, b2 = params["w2"].astype(act_dtype), params["b2"]   # (8, 15), (8, 1)
    w3, b3 = params["w3"].astype(act_dtype), params["b3"]   # (1, 8),  (1, 1)

    tn, n_pad = _choose_tile(n, tile_n)

    # Batch on the lane axis: (3, N) lane-dense, zero-padded to n_pad columns.
    # Under jit the transpose + pad fuse into a single HBM pass, and the pad
    # columns are finite/isolated (each output column depends only on its
    # own input column) and are sliced off below.
    xt = jnp.asarray(x, jnp.float32).T
    if n_pad != n:
        xt = jnp.pad(xt, ((0, 0), (0, n_pad - n)))

    # Weights/biases: whole-array blocks with a constant index map — they stay
    # VMEM-resident across grid steps (no re-DMA).
    const = lambda a: pl.BlockSpec(a.shape, lambda i: (0, 0))

    kernel = functools.partial(_mlp_kernel, act_dtype=act_dtype)

    out = pl.pallas_call(
        kernel,
        out_shape=jax.ShapeDtypeStruct((1, n_pad), jnp.float32),
        grid=(n_pad // tn,),
        in_specs=[
            pl.BlockSpec((3, tn), lambda i: (0, i)),        # x tile (lane-dense)
            const(w1), const(b1),
            const(w2), const(b2),
            const(w3), const(b3),
        ],
        out_specs=pl.BlockSpec((1, tn), lambda i: (0, i)),  # lane-dense output
        compiler_params=pltpu.CompilerParams(
            dimension_semantics=("parallel",),
            vmem_limit_bytes=48 * 1024 * 1024,
        ),
    )(xt, w1, b1, w2, b2, w3, b3)

    return out[0, :n]                                       # (N,)


def make_params(p_vec):
    """Slice the 197-element parameter vector exactly as MLPregression.__init__.

    Biases are kept as column vectors so they broadcast over the lane (batch)
    axis inside the kernel.
    """
    p = jnp.asarray(p_vec, dtype=jnp.float32)
    return {
        "w1": p[0:45].reshape(15, 3),
        "b1": p[45:60].reshape(15, 1),
        "w2": p[60:180].reshape(8, 15),
        "b2": p[180:188].reshape(8, 1),
        "w3": p[188:196].reshape(1, 8),
        "b3": p[196:197].reshape(1, 1),
    }


def _reference(x, params):
    """Pure-JAX f32 reference (torch semantics) for correctness checking."""
    h1 = jax.nn.sigmoid(x @ params["w1"].T + params["b1"].T)
    h2 = jax.nn.sigmoid(h1 @ params["w2"].T + params["b2"].T)
    out = h2 @ params["w3"].T + params["b3"].T
    return out[:, 0]


def _default_bf16_act():
    """bf16 activations only on chips with a bf16 EUP/VPU (v6e / v7x)."""
    try:
        kind = jax.devices()[0].device_kind.lower()
    except Exception:
        return False
    return ("v6" in kind) or ("v7" in kind)


if __name__ == "__main__":
    key = jax.random.PRNGKey(0)
    k_p, k_x1, k_x2 = jax.random.split(key, 3)

    # Deterministic synthetic parameter vector p (197 floats), as the module's
    # __init__ expects a numpy array `p` of length >= 197.
    p_vec = 0.1 * jax.random.normal(k_p, (197,), dtype=jnp.float32)
    params = make_params(np.asarray(p_vec))

    bf16 = _default_bf16_act()
    tol = dict(rtol=2e-2, atol=2e-2) if bf16 else dict(rtol=1e-5, atol=1e-5)

    # Small batch of inputs with 3 features each (single grid step).
    x_small = jax.random.normal(k_x1, (8, 3), dtype=jnp.float32)
    y_small = jax.block_until_ready(mlp_regression(x_small, params, bf16_act=bf16))
    np.testing.assert_allclose(np.asarray(y_small),
                               np.asarray(_reference(x_small, params)), **tol)

    # Larger batch with a small tile to exercise the multi-step grid,
    # double-buffered pipelining, and the pad/slice path (300 -> 2 x 256 lanes).
    x_big = jax.random.normal(k_x2, (300, 3), dtype=jnp.float32)
    y_big = jax.block_until_ready(
        mlp_regression(x_big, params, tile_n=256, bf16_act=bf16))
    np.testing.assert_allclose(np.asarray(y_big),
                               np.asarray(_reference(x_big, params)), **tol)

    print("KERNEL_OK")
</pallas_src>

<mosaic_0001>
module attributes {stable_mosaic.version = 11 : i64} {
  func.func @_mlp_kernel(%arg0: i32, %arg1: memref<3x128xf32, #tpu.memory_space<vmem>>, %arg2: memref<15x3xf32, #tpu.memory_space<vmem>>, %arg3: memref<15x1xf32, #tpu.memory_space<vmem>>, %arg4: memref<8x15xf32, #tpu.memory_space<vmem>>, %arg5: memref<8x1xf32, #tpu.memory_space<vmem>>, %arg6: memref<1x8xf32, #tpu.memory_space<vmem>>, %arg7: memref<1x1xf32, #tpu.memory_space<vmem>>, %arg8: memref<1x128xf32, #tpu.memory_space<vmem>>) attributes {dimension_semantics = [#tpu.dimension_semantics<parallel>], iteration_bounds = array<i64: 1>, scalar_prefetch = 0 : i64, scratch_operands = 0 : i64, tpu.core_type = #tpu.core_type<tc>, window_params = [{transform_indices = @transform_0, window_bounds = array<i64: 3, 128>}, {pipeline_mode = #tpu.pipeline_mode<synchronous>, transform_indices = @transform_1, window_bounds = array<i64: 15, 3>}, {pipeline_mode = #tpu.pipeline_mode<synchronous>, transform_indices = @transform_2, window_bounds = array<i64: 15, 1>}, {pipeline_mode = #tpu.pipeline_mode<synchronous>, transform_indices = @transform_3, window_bounds = array<i64: 8, 15>}, {pipeline_mode = #tpu.pipeline_mode<synchronous>, transform_indices = @transform_4, window_bounds = array<i64: 8, 1>}, {pipeline_mode = #tpu.pipeline_mode<synchronous>, transform_indices = @transform_5, window_bounds = array<i64: 1, 8>}, {pipeline_mode = #tpu.pipeline_mode<synchronous>, transform_indices = @transform_6, window_bounds = array<i64: 1, 1>}, {transform_indices = @transform_7, window_bounds = array<i64: 1, 128>}]} {
    %c0 = arith.constant 0 : index
    %c0_0 = arith.constant 0 : index
    %0 = vector.load %arg1[%c0, %c0_0] : memref<3x128xf32, #tpu.memory_space<vmem>>, vector<3x128xf32>
    %c0_1 = arith.constant 0 : index
    %c0_2 = arith.constant 0 : index
    %1 = vector.load %arg2[%c0_1, %c0_2] : memref<15x3xf32, #tpu.memory_space<vmem>>, vector<15x3xf32>
    %cst = arith.constant dense<0.000000e+00> : vector<15x128xf32>
    %2 = tpu.matmul %1, %0, %cst {dimension_numbers = #tpu.dot_dimension_numbers<[1], [0], [0], [1], [0, 0, 1, 1], [], []>} : vector<15x3xf32>, vector<3x128xf32>, vector<15x128xf32> -> vector<15x128xf32>
    %c0_3 = arith.constant 0 : index
    %c0_4 = arith.constant 0 : index
    %3 = vector.load %arg3[%c0_3, %c0_4] : memref<15x1xf32, #tpu.memory_space<vmem>>, vector<15x1xf32>
    %4 = vector.broadcast %3 : vector<15x1xf32> to vector<15x128xf32>
    %5 = arith.addf %2, %4 : vector<15x128xf32>
    %cst_5 = arith.constant 5.000000e-01 : f32
    %6 = vector.broadcast %cst_5 : f32 to vector<15x128xf32>
    %7 = arith.mulf %6, %5 : vector<15x128xf32>
    %8 = math.tanh %7 : vector<15x128xf32>
    %cst_6 = arith.constant 5.000000e-01 : f32
    %9 = vector.broadcast %cst_6 : f32 to vector<15x128xf32>
    %10 = arith.mulf %9, %8 : vector<15x128xf32>
    %cst_7 = arith.constant 5.000000e-01 : f32
    %11 = vector.broadcast %cst_7 : f32 to vector<15x128xf32>
    %12 = arith.addf %10, %11 : vector<15x128xf32>
    %c0_8 = arith.constant 0 : index
    %c0_9 = arith.constant 0 : index
    %13 = vector.load %arg4[%c0_8, %c0_9] : memref<8x15xf32, #tpu.memory_space<vmem>>, vector<8x15xf32>
    %cst_10 = arith.constant dense<0.000000e+00> : vector<8x128xf32>
    %14 = tpu.matmul %13, %12, %cst_10 {dimension_numbers = #tpu.dot_dimension_numbers<[1], [0], [0], [1], [0, 0, 1, 1], [], []>} : vector<8x15xf32>, vector<15x128xf32>, vector<8x128xf32> -> vector<8x128xf32>
    %c0_11 = arith.constant 0 : index
    %c0_12 = arith.constant 0 : index
    %15 = vector.load %arg5[%c0_11, %c0_12] : memref<8x1xf32, #tpu.memory_space<vmem>>, vector<8x1xf32>
    %16 = vector.broadcast %15 : vector<8x1xf32> to vector<8x128xf32>
    %17 = arith.addf %14, %16 : vector<8x128xf32>
    %cst_13 = arith.constant 5.000000e-01 : f32
    %18 = vector.broadcast %cst_13 : f32 to vector<8x128xf32>
    %19 = arith.mulf %18, %17 : vector<8x128xf32>
    %20 = math.tanh %19 : vector<8x128xf32>
    %cst_14 = arith.constant 5.000000e-01 : f32
    %21 = vector.broadcast %cst_14 : f32 to vector<8x128xf32>
    %22 = arith.mulf %21, %20 : vector<8x128xf32>
    %cst_15 = arith.constant 5.000000e-01 : f32
    %23 = vector.broadcast %cst_15 : f32 to vector<8x128xf32>
    %24 = arith.addf %22, %23 : vector<8x128xf32>
    %c0_16 = arith.constant 0 : index
    %c0_17 = arith.constant 0 : index
    %25 = vector.load %arg6[%c0_16, %c0_17] : memref<1x8xf32, #tpu.memory_space<vmem>>, vector<1x8xf32>
    %cst_18 = arith.constant dense<0.000000e+00> : vector<1x128xf32>
    %26 = tpu.matmul %25, %24, %cst_18 {dimension_numbers = #tpu.dot_dimension_numbers<[1], [0], [0], [1], [0, 0, 1, 1], [], []>} : vector<1x8xf32>, vector<8x128xf32>, vector<1x128xf32> -> vector<1x128xf32>
    %c0_19 = arith.constant 0 : index
    %c0_20 = arith.constant 0 : index
    %27 = vector.load %arg7[%c0_19, %c0_20] : memref<1x1xf32, #tpu.memory_space<vmem>>, vector<1x1xf32>
    %28 = vector.broadcast %27 : vector<1x1xf32> to vector<1x128xf32>
    %29 = arith.addf %26, %28 : vector<1x128xf32>
    %c0_21 = arith.constant 0 : index
    %c0_22 = arith.constant 0 : index
    %30 = vector.load %arg8[%c0_21, %c0_22] : memref<1x128xf32, #tpu.memory_space<vmem>>, vector<1x128xf32>
    tpu.vector_store %arg8[%c0_21, %c0_22], %29 {strides = array<i32>} : memref<1x128xf32, #tpu.memory_space<vmem>>, vector<1x128xf32>,
    return
  }
  func.func @transform_0(%arg0: i32) -> (i32, i32) {
    %c0_i32 = arith.constant 0 : i32
    %c0_i32_0 = arith.constant 0 : i32
    return %c0_i32, %arg0 : i32, i32
  }
  func.func @transform_1(%arg0: i32) -> (i32, i32) {
    %c0_i32 = arith.constant 0 : i32
    %c0_i32_0 = arith.constant 0 : i32
    %c0_i32_1 = arith.constant 0 : i32
    return %c0_i32, %c0_i32_0 : i32, i32
  }
  func.func @transform_2(%arg0: i32) -> (i32, i32) {
    %c0_i32 = arith.constant 0 : i32
    %c0_i32_0 = arith.constant 0 : i32
    %c0_i32_1 = arith.constant 0 : i32
    return %c0_i32, %c0_i32_0 : i32, i32
  }
  func.func @transform_3(%arg0: i32) -> (i32, i32) {
    %c0_i32 = arith.constant 0 : i32
    %c0_i32_0 = arith.constant 0 : i32
    %c0_i32_1 = arith.constant 0 : i32
    return %c0_i32, %c0_i32_0 : i32, i32
  }
  func.func @transform_4(%arg0: i32) -> (i32, i32) {
    %c0_i32 = arith.constant 0 : i32
    %c0_i32_0 = arith.constant 0 : i32
    %c0_i32_1 = arith.constant 0 : i32
    return %c0_i32, %c0_i32_0 : i32, i32
  }
  func.func @transform_5(%arg0: i32) -> (i32, i32) {
    %c0_i32 = arith.constant 0 : i32
    %c0_i32_0 = arith.constant 0 : i32
    %c0_i32_1 = arith.constant 0 : i32
    return %c0_i32, %c0_i32_0 : i32, i32
  }
  func.func @transform_6(%arg0: i32) -> (i32, i32) {
    %c0_i32 = arith.constant 0 : i32
    %c0_i32_0 = arith.constant 0 : i32
    %c0_i32_1 = arith.constant 0 : i32
    return %c0_i32, %c0_i32_0 : i32, i32
  }
  func.func @transform_7(%arg0: i32) -> (i32, i32) {
    %c0_i32 = arith.constant 0 : i32
    %c0_i32_0 = arith.constant 0 : i32
    return %c0_i32, %arg0 : i32, i32
  }
}

</mosaic_0001>

<llo_original>
// kernel: mlp_regression.1
$region0: #{mlp_regression.1}
  #allocation0 [shape = 'u32[]', space=smem, size = 0x4, offset = 0x4, fixed_abs, tag = 'smem constant byte address 0x4 - core index']
  #allocation1 [shape = 'u32[144,128]{1,0:T(1,128)}', space=vmem, size = 0x12000, scoped, tag = 'internal scratch']
  #allocation2 [shape = 'f32[1,1]{1,0:T(1,128)S(1)}', space=vmem, size = 0x200, scoped, tag = 'scoped memory for mlp_regression.1']
  %s0 = inlined_call_operand.vmem [shape: f32[3,128], index: 0, kind: input, shape index: {}]
  %s1 = inlined_call_operand.vmem [shape: f32[15,3], index: 1, kind: input, shape index: {}]
  %s2 = inlined_call_operand.vmem [shape: f32[15,1], index: 2, kind: input, shape index: {}]
  %s3 = inlined_call_operand.vmem [shape: f32[8,15], index: 3, kind: input, shape index: {}]
  %s4 = inlined_call_operand.vmem [shape: f32[8,1], index: 4, kind: input, shape index: {}]
  %s5 = inlined_call_operand.vmem [shape: f32[1,8], index: 5, kind: input, shape index: {}]
  %s6 = inlined_call_operand.<no memory space> [shape: f32[1,1], index: 6, kind: input, shape index: {}]
  %s7 = inlined_call_operand.vmem [shape: f32[1,128], index: 7, kind: output, shape index: {}]
  %s8 = sld [smem:[#allocation0]]
  $region38: #{mlp_regression.1} parent=0
    _
  %s10 = ssub.s32 1, %s8
  %s11 = scalar_select 0, %s10, %s8
  %v12 = vstv %s6
  %13 = vst [vmem:[#allocation2] sm:$0x1] %v12
  // Predicated region
  $region2: #{mlp_regression.1} parent=0 // pred_check
    _
  $region3: #{mlp_regression.1} parent=0 // pred_check_branch
    %15 = sbr.rel (0) target = $region5
  $region4: #{mlp_regression.1} parent=0 // pred_region
    _
  $region5: #{mlp_regression.1} parent=0 // pred_fallthru
    _
  // Predicated region
  $region6: #{mlp_regression.1} parent=0 // pred_check
    _
  $region7: #{mlp_regression.1} parent=0 // pred_check_branch
    %17 = sbr.rel (0) target = $region9
  $region8: #{mlp_regression.1} parent=0 // pred_region
    _
  $region9: #{mlp_regression.1} parent=0 // pred_fallthru
    _
  // Predicated region
  $region10: #{mlp_regression.1} parent=0 // pred_check
    _
  $region11: #{mlp_regression.1} parent=0 // pred_check_branch
    %19 = sbr.rel (0) target = $region13
  $region12: #{mlp_regression.1} parent=0 // pred_region
    _
  $region13: #{mlp_regression.1} parent=0 // pred_fallthru
    _
  // Predicated region
  $region14: #{mlp_regression.1} parent=0 // pred_check
    _
  $region15: #{mlp_regression.1} parent=0 // pred_check_branch
    %21 = sbr.rel (0) target = $region17
  $region16: #{mlp_regression.1} parent=0 // pred_region
    _
  $region17: #{mlp_regression.1} parent=0 // pred_fallthru
    _
  // Predicated region
  $region18: #{mlp_regression.1} parent=0 // pred_check
    _
  $region19: #{mlp_regression.1} parent=0 // pred_check_branch
    %23 = sbr.rel (0) target = $region21
  $region20: #{mlp_regression.1} parent=0 // pred_region
    _
  $region21: #{mlp_regression.1} parent=0 // pred_fallthru
    _
  // Predicated region
  $region22: #{mlp_regression.1} parent=0 // pred_check
    _
  $region23: #{mlp_regression.1} parent=0 // pred_check_branch
    %25 = sbr.rel (0) target = $region25
  $region24: #{mlp_regression.1} parent=0 // pred_region
    _
  $region25: #{mlp_regression.1} parent=0 // pred_fallthru
    _
  // Predicated region
  $region26: #{mlp_regression.1} parent=0 // pred_check
    _
  $region27: #{mlp_regression.1} parent=0 // pred_check_branch
    %27 = sbr.rel (0) target = $region29
  $region28: #{mlp_regression.1} parent=0 // pred_region
    _
  $region29: #{mlp_regression.1} parent=0 // pred_fallthru
    _
  %v28 = vld [vmem:[%s0] sm:$0x7]
  %v29 = vld [vmem:[%s1] sm:$0xff]
  %v30 = vld [vmem:[%s1 + $0x8] sm:$0x7f]
  %v31 = vld [vmem:[%s2] sm:$0xff]
  %v32 = vld [vmem:[%s2 + $0x8] sm:$0x7f]
  %34 = vset.pattern.permute.xlu0 0
  %35 = vperm.xlu0 %34, %v31
  %v36 = vpop.permute.xlu0 %35
  %39 = vset.pattern.permute.xlu0 0
  %40 = vperm.xlu0 %39, %v32
  %v41 = vpop.permute.xlu0 %40
  %vm43 = vcmask 23552
  %v45 = vsel %vm43, %v29, 0
  %v48 = vsel %vm43, %v30, 0
  %vm50 = vcmask 1042432
  %v52 = vsel %vm50, %v28, 0
  %54 = vmatprep.subr.mxu0 0.0
  %55 = vmatpush1.msra.mxu0 0.0
  %56 = vmatprep.subr.mxu0 0.0
  %57 = vmatpush1.msra.mxu0 0.0
  %58 = vmatprep.subr.mxu0 0.0
  %59 = vmatpush1.msra.mxu0 0.0
  %60 = vmatprep.subr.mxu0 0.0
  %61 = vmatpush1.msra.mxu0 0.0
  %62 = vmatprep.subr.mxu0 0.0
  %63 = vmatpush1.msra.mxu0 0.0
  %64 = vmatprep.subr.mxu0 0.0
  %65 = vmatpush1.msra.mxu0 0.0
  %66 = vmatprep.subr.mxu0 0.0
  %67 = vmatpush1.msra.mxu0 0.0
  %68 = vmatprep.subr.mxu0 0.0
  %69 = vmatpush1.msra.mxu0 0.0
  %70 = vmatprep.subr.mxu0 0.0
  %71 = vmatpush1.msra.mxu0 0.0
  %72 = vmatprep.subr.mxu0 0.0
  %73 = vmatpush1.msra.mxu0 0.0
  %74 = vmatprep.subr.mxu0 0.0
  %75 = vmatpush1.msra.mxu0 0.0
  %76 = vmatprep.subr.mxu0 0.0
  %77 = vmatpush1.msra.mxu0 0.0
  %78 = vmatprep.subr.mxu0 0.0
  %79 = vmatpush1.msra.mxu0 0.0
  %80 = vmatprep.subr.mxu0 0.0
  %81 = vmatpush1.msra.mxu0 0.0
  %82 = vmatprep.subr.mxu0 0.0
  %83 = vmatpush1.msra.mxu0 0.0
  %84 = vmatprep.subr.mxu0 0.0
  %85 = vmatpush1.msra.mxu0 %v52
  %86 = vmatprep.subr.mxu0 0.0
  %87 = vmatpush2.msra.mxu0 0.0
  %88 = vmatprep.subr.mxu0 0.0
  %89 = vmatpush2.msra.mxu0 0.0
  %90 = vmatprep.subr.mxu0 0.0
  %91 = vmatpush2.msra.mxu0 0.0
  %92 = vmatprep.subr.mxu0 0.0
  %93 = vmatpush2.msra.mxu0 0.0
  %94 = vmatprep.subr.mxu0 0.0
  %95 = vmatpush2.msra.mxu0 0.0
  %96 = vmatprep.subr.mxu0 0.0
  %97 = vmatpush2.msra.mxu0 0.0
  %98 = vmatprep.subr.mxu0 0.0
  %99 = vmatpush2.msra.mxu0 0.0
  %100 = vmatprep.subr.mxu0 0.0
  %101 = vmatpush2.msra.mxu0 0.0
  %102 = vmatprep.subr.mxu0 0.0
  %103 = vmatpush2.msra.mxu0 0.0
  %104 = vmatprep.subr.mxu0 0.0
  %105 = vmatpush2.msra.mxu0 0.0
  %106 = vmatprep.subr.mxu0 0.0
  %107 = vmatpush2.msra.mxu0 0.0
  %108 = vmatprep.subr.mxu0 0.0
  %109 = vmatpush2.msra.mxu0 0.0
  %110 = vmatprep.subr.mxu0 0.0
  %111 = vmatpush2.msra.mxu0 0.0
  %112 = vmatprep.subr.mxu0 0.0
  %113 = vmatpush2.msra.mxu0 0.0
  %114 = vmatprep.subr.mxu0 0.0
  %115 = vmatpush2.msra.mxu0 0.0
  %116 = vmatprep.subr.mxu0 0.0
  %117 = vmatpush2.msra.mxu0 0.0
  %118 = vmatprep.mubr.f32.mxu0 0.0
  %119 = vmatmul.mubr.f32.gmra.mxu0 %v45
  %v120 = vpop.f32.mrf.mxu0
  %v121 = vadd.f32 %v36, %v120
  %v122 = vpop.f32.mrf.mxu0
  %123 = vmatprep.mubr.f32.mxu0 0.0
  %124 = vmatmul.mubr.f32.gmra.mxu0 %v48
  %v125 = vpop.f32.mrf.mxu0
  %v126 = vadd.f32 %v41, %v125
  %v127 = vpop.f32.mrf.mxu0
  %128 = vdwg.mxu0
  %v129 = vmul.f32 %v121, 0.5
  %v130 = vmul.f32 %v126, 0.5
  %v131 = vtanh.pop %v129
  %v132 = vtanh.pop %v130
  %v133 = vmul.f32 %v131, 0.5
  %v134 = vmul.f32 %v132, 0.5
  %v135 = vadd.f32 %v133, 0.5
  %v136 = vadd.f32 %v134, 0.5
  %v137 = vld [vmem:[%s3] sm:$0xff]
  %v138 = vld [vmem:[%s4] sm:$0xff]
  %140 = vset.pattern.permute.xlu0 0
  %141 = vperm.xlu0 %140, %v138
  %v142 = vpop.permute.xlu0 %141
  %vm144 = vcmask 121856
  %v146 = vsel %vm144, %v137, 0
  %vm148 = vcmask 1046528
  %v150 = vsel %vm148, %v136, 0
  %152 = vmatprep.subr.mxu0 0.0
  %153 = vmatpush1.msra.mxu0 0.0
  %154 = vmatprep.subr.mxu0 0.0
  %155 = vmatpush1.msra.mxu0 0.0
  %156 = vmatprep.subr.mxu0 0.0
  %157 = vmatpush1.msra.mxu0 0.0
  %158 = vmatprep.subr.mxu0 0.0
  %159 = vmatpush1.msra.mxu0 0.0
  %160 = vmatprep.subr.mxu0 0.0
  %161 = vmatpush1.msra.mxu0 0.0
  %162 = vmatprep.subr.mxu0 0.0
  %163 = vmatpush1.msra.mxu0 0.0
  %164 = vmatprep.subr.mxu0 0.0
  %165 = vmatpush1.msra.mxu0 0.0
  %166 = vmatprep.subr.mxu0 0.0
  %167 = vmatpush1.msra.mxu0 0.0
  %168 = vmatprep.subr.mxu0 0.0
  %169 = vmatpush1.msra.mxu0 0.0
  %170 = vmatprep.subr.mxu0 0.0
  %171 = vmatpush1.msra.mxu0 0.0
  %172 = vmatprep.subr.mxu0 0.0
  %173 = vmatpush1.msra.mxu0 0.0
  %174 = vmatprep.subr.mxu0 0.0
  %175 = vmatpush1.msra.mxu0 0.0
  %176 = vmatprep.subr.mxu0 0.0
  %177 = vmatpush1.msra.mxu0 0.0
  %178 = vmatprep.subr.mxu0 0.0
  %179 = vmatpush1.msra.mxu0 0.0
  %180 = vmatprep.subr.mxu0 0.0
  %181 = vmatpush1.msra.mxu0 %v150
  %182 = vmatprep.subr.mxu0 0.0
  %183 = vmatpush1.msra.mxu0 %v135
  %184 = vmatprep.subr.mxu0 0.0
  %185 = vmatpush2.msra.mxu0 0.0
  %186 = vmatprep.subr.mxu0 0.0
  %187 = vmatpush2.msra.mxu0 0.0
  %188 = vmatprep.subr.mxu0 0.0
  %189 = vmatpush2.msra.mxu0 0.0
  %190 = vmatprep.subr.mxu0 0.0
  %191 = vmatpush2.msra.mxu0 0.0
  %192 = vmatprep.subr.mxu0 0.0
  %193 = vmatpush2.msra.mxu0 0.0
  %194 = vmatprep.subr.mxu0 0.0
  %195 = vmatpush2.msra.mxu0 0.0
  %196 = vmatprep.subr.mxu0 0.0
  %197 = vmatpush2.msra.mxu0 0.0
  %198 = vmatprep.subr.mxu0 0.0
  %199 = vmatpush2.msra.mxu0 0.0
  %200 = vmatprep.subr.mxu0 0.0
  %201 = vmatpush2.msra.mxu0 0.0
  %202 = vmatprep.subr.mxu0 0.0
  %203 = vmatpush2.msra.mxu0 0.0
  %204 = vmatprep.subr.mxu0 0.0
  %205 = vmatpush2.msra.mxu0 0.0
  %206 = vmatprep.subr.mxu0 0.0
  %207 = vmatpush2.msra.mxu0 0.0
  %208 = vmatprep.subr.mxu0 0.0
  %209 = vmatpush2.msra.mxu0 0.0
  %210 = vmatprep.subr.mxu0 0.0
  %211 = vmatpush2.msra.mxu0 0.0
  %212 = vmatprep.subr.mxu0 0.0
  %213 = vmatpush2.msra.mxu0 0.0
  %214 = vmatprep.subr.mxu0 0.0
  %215 = vmatpush2.msra.mxu0 0.0
  %216 = vmatprep.mubr.f32.mxu0 0.0
  %217 = vmatmul.mubr.f32.gmra.mxu0 %v146
  %v218 = vpop.f32.mrf.mxu0
  %v219 = vadd.f32 %v142, %v218
  %v220 = vpop.f32.mrf.mxu0
  %221 = vdwg.mxu0
  %v222 = vmul.f32 %v219, 0.5
  %v223 = vtanh.pop %v222
  %v224 = vmul.f32 %v223, 0.5
  %v225 = vadd.f32 %v224, 0.5
  %v226 = vld [vmem:[%s5] sm:$0x1]
  %v227 = vld [vmem:[#allocation2] sm:$0x1]
  %229 = vset.pattern.permute.xlu0 0
  %230 = vperm.xlu0 %229, %v227
  %v231 = vpop.permute.xlu0 %230
  %v233 = vlaneseq
  %v234 = vshrl.u32 %v233, 7
  %v235 = vsub.s32 0, %v234
  %v236 = vrot.slane %v231, %v235
  %vm237 = vcmask 64512
  %v239 = vsel %vm237, %v226, 0
  %241 = vmatprep.subr.mxu0 0.0
  %242 = vmatpush1.msra.mxu0 0.0
  %243 = vmatprep.subr.mxu0 0.0
  %244 = vmatpush1.msra.mxu0 0.0
  %245 = vmatprep.subr.mxu0 0.0
  %246 = vmatpush1.msra.mxu0 0.0
  %247 = vmatprep.subr.mxu0 0.0
  %248 = vmatpush1.msra.mxu0 0.0
  %249 = vmatprep.subr.mxu0 0.0
  %250 = vmatpush1.msra.mxu0 0.0
  %251 = vmatprep.subr.mxu0 0.0
  %252 = vmatpush1.msra.mxu0 0.0
  %253 = vmatprep.subr.mxu0 0.0
  %254 = vmatpush1.msra.mxu0 0.0
  %255 = vmatprep.subr.mxu0 0.0
  %256 = vmatpush1.msra.mxu0 0.0
  %257 = vmatprep.subr.mxu0 0.0
  %258 = vmatpush1.msra.mxu0 0.0
  %259 = vmatprep.subr.mxu0 0.0
  %260 = vmatpush1.msra.mxu0 0.0
  %261 = vmatprep.subr.mxu0 0.0
  %262 = vmatpush1.msra.mxu0 0.0
  %263 = vmatprep.subr.mxu0 0.0
  %264 = vmatpush1.msra.mxu0 0.0
  %265 = vmatprep.subr.mxu0 0.0
  %266 = vmatpush1.msra.mxu0 0.0
  %267 = vmatprep.subr.mxu0 0.0
  %268 = vmatpush1.msra.mxu0 0.0
  %269 = vmatprep.subr.mxu0 0.0
  %270 = vmatpush1.msra.mxu0 0.0
  %271 = vmatprep.subr.mxu0 0.0
  %272 = vmatpush1.msra.mxu0 %v225
  %273 = vmatprep.subr.mxu0 0.0
  %274 = vmatpush2.msra.mxu0 0.0
  %275 = vmatprep.subr.mxu0 0.0
  %276 = vmatpush2.msra.mxu0 0.0
  %277 = vmatprep.subr.mxu0 0.0
  %278 = vmatpush2.msra.mxu0 0.0
  %279 = vmatprep.subr.mxu0 0.0
  %280 = vmatpush2.msra.mxu0 0.0
  %281 = vmatprep.subr.mxu0 0.0
  %282 = vmatpush2.msra.mxu0 0.0
  %283 = vmatprep.subr.mxu0 0.0
  %284 = vmatpush2.msra.mxu0 0.0
  %285 = vmatprep.subr.mxu0 0.0
  %286 = vmatpush2.msra.mxu0 0.0
  %287 = vmatprep.subr.mxu0 0.0
  %288 = vmatpush2.msra.mxu0 0.0
  %289 = vmatprep.subr.mxu0 0.0
  %290 = vmatpush2.msra.mxu0 0.0
  %291 = vmatprep.subr.mxu0 0.0
  %292 = vmatpush2.msra.mxu0 0.0
  %293 = vmatprep.subr.mxu0 0.0
  %294 = vmatpush2.msra.mxu0 0.0
  %295 = vmatprep.subr.mxu0 0.0
  %296 = vmatpush2.msra.mxu0 0.0
  %297 = vmatprep.subr.mxu0 0.0
  %298 = vmatpush2.msra.mxu0 0.0
  %299 = vmatprep.subr.mxu0 0.0
  %300 = vmatpush2.msra.mxu0 0.0
  %301 = vmatprep.subr.mxu0 0.0
  %302 = vmatpush2.msra.mxu0 0.0
  %303 = vmatprep.subr.mxu0 0.0
  %304 = vmatpush2.msra.mxu0 0.0
  %305 = vmatprep.mubr.f32.mxu0 0.0
  %306 = vmatmul.mubr.f32.gmra.mxu0 %v239
  %v307 = vpop.f32.mrf.mxu0
  %v308 = vadd.f32 %v236, %v307
  %v309 = vpop.f32.mrf.mxu0
  %310 = vdwg.mxu0
  %311 = vst [vmem:[%s7] sm:$0x1] %v308
  // Predicated region
  $region30: #{mlp_regression.1} parent=0 // pred_check
    _
  $region31: #{mlp_regression.1} parent=0 // pred_check_branch
    %313 = sbr.rel (0) target = $region33
  $region32: #{mlp_regression.1} parent=0 // pred_region
    _
  $region33: #{mlp_regression.1} parent=0 // pred_fallthru
    _
  // Predicated region
  $region34: #{mlp_regression.1} parent=0 // pred_check
    _
  $region35: #{mlp_regression.1} parent=0 // pred_check_branch
    %315 = sbr.rel (0) target = $region37
  $region36: #{mlp_regression.1} parent=0 // pred_region
    _
  $region37: #{mlp_regression.1} parent=0 // pred_fallthru
    _

</llo_original>
